<compile_context>
chip_gen: v7x
topology: tpu7x:2x2x1
jax: 0.10.0
libtpu: 0.0.40
codegen_flags: <defaults>
</compile_context>

<pallas_src>
import functools
import math

import jax
import jax.numpy as jnp
from jax.experimental import pallas as pl
from jax.experimental.pallas import tpu as pltpu


def _actor_kernel(*refs, compute_logp):
    if compute_logp:
        (obs_t_ref, act_ref, w1_ref, b1_ref, w2_ref, b2_ref, w3_ref, b3_ref,
         logits_t_ref, logp_ref) = refs
    else:
        (obs_t_ref, w1_ref, b1_ref, w2_ref, b2_ref, w3_ref, b3_ref,
         logits_t_ref) = refs
        act_ref = logp_ref = None

    # Batch (TB) sits on the lane axis for every matmul; MXU accumulates in f32,
    # biases/tanh stay f32 on the VPU/EUP.
    x_t = obs_t_ref[...]                                                        # (obs_dim, TB)
    h1_t = jnp.tanh(jnp.dot(w1_ref[...], x_t,
                            preferred_element_type=jnp.float32) + b1_ref[...])  # (H1, TB)
    h2_t = jnp.tanh(jnp.dot(w2_ref[...], h1_t.astype(w2_ref.dtype),
                            preferred_element_type=jnp.float32) + b2_ref[...])  # (H2, TB)
    logits_t = jnp.dot(w3_ref[...], h2_t.astype(w3_ref.dtype),
                       preferred_element_type=jnp.float32) + b3_ref[...]        # (A_pad, TB)

    # Lane-dense store: (A_pad, TB) with TB on the 128-lane axis.
    logits_t_ref[...] = logits_t.astype(logits_t_ref.dtype)

    if compute_logp:
        # Categorical(logits).log_prob(act) = (logits - logsumexp(logits))[act] over the action
        # (sublane) axis. Padded action rows carry a -1e30 bias from the wrapper, so their exp
        # underflows to zero and no explicit validity mask is required.
        m = jnp.max(logits_t, axis=0, keepdims=True)
        lse = m + jnp.log(jnp.sum(jnp.exp(logits_t - m), axis=0, keepdims=True))
        logp_t = logits_t - lse                                                 # (A_pad, TB)
        row_ids = jax.lax.broadcasted_iota(jnp.int32, logits_t.shape, 0)
        sel = row_ids == act_ref[...]                                           # act bcast over sublanes
        logp_ref[...] = jnp.sum(jnp.where(sel, logp_t, 0.0),
                                axis=0, keepdims=True).astype(logp_ref.dtype)


def _pick_batch_tile(B, max_tile, min_tiles):
    """Batch tile: as large as possible (amortizes ~0.35us/grid-step overhead), a multiple of
    128 when the batch is actually tiled, and at least `min_tiles` tiles so the "parallel" grid
    axis can split across TensorCores (pass min_tiles=2 on v7x)."""
    if B <= 128 or (min_tiles <= 1 and B <= max_tile):
        return B
    tb = min(max_tile, pl.cdiv(B, max(min_tiles, 1)))
    tb = max(128, pl.cdiv(tb, 128) * 128)
    return min(tb, max_tile)


def categorical_actor_forward(obs, act, params, *, matmul_dtype=jnp.bfloat16,
                              max_batch_tile=2048, min_batch_tiles=1,
                              return_batch_major=False):
    """Pallas forward of CategoricalActor.

    obs: [B, obs_dim] f32, act: [B] int32 or None.
    Returns (logits, logp_a):
      logits : [act_dim, B] f32 (lane-dense, action-major) by default; [B, act_dim] if
               return_batch_major=True.  The Categorical "policy" is represented by its logits.
      logp_a : [B] f32 log_prob(act), or None when act is None.
    matmul_dtype: dtype obs/weights are streamed in (default bf16; pass None for f32).
    min_batch_tiles: set to 2 on v7x so the parallel grid axis uses both TensorCores.
    """
    (w1, b1), (w2, b2), (w3, b3) = params
    B, obs_dim = obs.shape
    H1, H2 = w1.shape[1], w2.shape[1]
    act_dim = w3.shape[1]
    have_act = act is not None

    # Pad the action dimension up to a sublane multiple. Padded rows get a -1e30 bias so the
    # in-kernel logsumexp ignores them without any masking; they are sliced off on return.
    A_pad = max(8, pl.cdiv(act_dim, 8) * 8)
    if A_pad != act_dim:
        w3 = jnp.pad(w3, ((0, 0), (0, A_pad - act_dim)))
        b3 = jnp.pad(b3, ((0, 0), (0, A_pad - act_dim)), constant_values=-1e30)

    # One-time layout plumbing: transpose so batch rides the lane axis inside the kernel.
    obs_t = obs.T                                       # (obs_dim, B)
    w1_t, w2_t, w3_t = w1.T, w2.T, w3.T                 # (H1,obs_dim), (H2,H1), (A_pad,H2)
    b1_t, b2_t, b3_t = b1.T, b2.T, b3.T                 # (H1,1), (H2,1), (A_pad,1)

    # Optional reduced-precision streaming of obs + weights (f32 accumulation in the MXU;
    # biases / tanh / logsumexp stay f32 so the VPU/EUP path is unchanged on v5e).
    if matmul_dtype is not None:
        obs_t = obs_t.astype(matmul_dtype)
        w1_t, w2_t, w3_t = (w.astype(matmul_dtype) for w in (w1_t, w2_t, w3_t))

    TB = _pick_batch_tile(B, max_batch_tile, min_batch_tiles)
    nb = pl.cdiv(B, TB)

    rep = lambda i: (0, 0)  # weights/biases resident across all grid steps

    in_specs = [pl.BlockSpec((obs_dim, TB), lambda i: (0, i))]   # obs tile, streamed/pipelined
    args = [obs_t]
    if have_act:
        in_specs.append(pl.BlockSpec((1, TB), lambda i: (0, i)))
        args.append(act.astype(jnp.int32).reshape(1, B))
    in_specs += [
        pl.BlockSpec((H1, obs_dim), rep),
        pl.BlockSpec((H1, 1), rep),
        pl.BlockSpec((H2, H1), rep),
        pl.BlockSpec((H2, 1), rep),
        pl.BlockSpec((A_pad, H2), rep),
        pl.BlockSpec((A_pad, 1), rep),
    ]
    args += [w1_t, b1_t, w2_t, b2_t, w3_t, b3_t]

    out_shape = [jax.ShapeDtypeStruct((A_pad, B), jnp.float32)]
    out_specs = [pl.BlockSpec((A_pad, TB), lambda i: (0, i))]
    if have_act:
        out_shape.append(jax.ShapeDtypeStruct((1, B), jnp.float32))
        out_specs.append(pl.BlockSpec((1, TB), lambda i: (0, i)))

    def _nbytes(a):
        return a.size * a.dtype.itemsize

    flops = 2 * B * (obs_dim * H1 + H1 * H2 + H2 * A_pad)
    transcendentals = B * (H1 + H2 + (A_pad + 1 if have_act else 0))
    bytes_accessed = (sum(_nbytes(a) for a in args)
                      + A_pad * B * 4 + (B * 4 if have_act else 0))

    outs = pl.pallas_call(
        functools.partial(_actor_kernel, compute_logp=have_act),
        out_shape=tuple(out_shape),
        grid=(nb,),
        in_specs=in_specs,
        out_specs=tuple(out_specs),
        compiler_params=pltpu.CompilerParams(
            dimension_semantics=("parallel",),
            vmem_limit_bytes=32 * 1024 * 1024,
        ),
        cost_estimate=pl.CostEstimate(
            flops=flops, transcendentals=transcendentals, bytes_accessed=bytes_accessed),
    )(*args)

    logits_t = outs[0]
    if A_pad != act_dim:
        logits_t = logits_t[:act_dim, :]
    logits = logits_t.T if return_batch_major else logits_t
    logp_a = outs[1][0, :] if have_act else None
    # TODO(synk): torch.distributions.Categorical object itself has no Pallas equivalent;
    # the policy is returned as its logits.
    return logits, logp_a


def init_linear(key, fan_in, fan_out):
    # Deterministic init mimicking torch.nn.Linear default: U(-1/sqrt(fan_in), 1/sqrt(fan_in)).
    kw, kb = jax.random.split(key)
    bound = 1.0 / math.sqrt(fan_in)
    # Stored as [in, out] (pre-transposed w.r.t. torch) so reference computes x @ W.
    w = jax.random.uniform(kw, (fan_in, fan_out), jnp.float32, -bound, bound)
    b = jax.random.uniform(kb, (1, fan_out), jnp.float32, -bound, bound)
    return w, b


def reference_forward(obs, act, params):
    (w1, b1), (w2, b2), (w3, b3) = params
    h = jnp.tanh(obs @ w1 + b1)
    h = jnp.tanh(h @ w2 + b2)
    logits = h @ w3 + b3
    logp = jax.nn.log_softmax(logits, axis=-1)
    logp_a = jnp.take_along_axis(logp, act[:, None], axis=-1)[:, 0]
    return logits, logp_a


if __name__ == "__main__":
    # Small shapes: batch=8, obs_dim=16, hidden_sizes=(32, 32), act_dim=8.
    B, obs_dim, act_dim = 8, 16, 8
    hidden_sizes = (32, 32)

    key = jax.random.PRNGKey(0)
    k_obs, k_act, k1, k2, k3 = jax.random.split(key, 5)

    obs = jax.random.normal(k_obs, (B, obs_dim), jnp.float32)
    act = jax.random.randint(k_act, (B,), 0, act_dim, jnp.int32)

    sizes = [obs_dim] + list(hidden_sizes) + [act_dim]
    params = [init_linear(k, sizes[j], sizes[j + 1]) for j, k in enumerate((k1, k2, k3))]

    logits_ref, logp_ref = reference_forward(obs, act, params)

    # 1) f32 path (matmul_dtype=None): tight tolerance vs reference.
    logits_am, logp_a = categorical_actor_forward(obs, act, params, matmul_dtype=None)
    (logits_am, logp_a) = jax.block_until_ready((logits_am, logp_a))
    assert logits_am.shape == (act_dim, B), f"unexpected logits shape {logits_am.shape}"
    assert logp_a.shape == (B,), f"unexpected logp shape {logp_a.shape}"
    assert jnp.allclose(logits_am.T, logits_ref, atol=1e-5, rtol=1e-5), "logits mismatch (f32)"
    assert jnp.allclose(logp_a, logp_ref, atol=1e-5, rtol=1e-5), "log_prob mismatch (f32)"

    # 2) act=None path: logp output and logsumexp work skipped at trace time.
    logits_only, logp_none = categorical_actor_forward(obs, None, params, matmul_dtype=None)
    logits_only = jax.block_until_ready(logits_only)
    assert logp_none is None
    assert jnp.allclose(logits_only.T, logits_ref, atol=1e-5, rtol=1e-5), "logits mismatch (no-act)"

    # 3) default bf16 streaming path: loose tolerance (bf16 mantissa).
    logits_bf, logp_bf = categorical_actor_forward(obs, act, params, return_batch_major=True)
    (logits_bf, logp_bf) = jax.block_until_ready((logits_bf, logp_bf))
    assert logits_bf.shape == (B, act_dim)
    assert jnp.allclose(logits_bf, logits_ref, atol=5e-2), "logits mismatch (bf16)"
    assert jnp.allclose(logp_bf, logp_ref, atol=5e-2), "log_prob mismatch (bf16)"

    print("KERNEL_OK")
</pallas_src>

<mosaic_0001>
module attributes {stable_mosaic.version = 11 : i64} {
  func.func @_actor_kernel(%arg0: i32, %arg1: memref<16x8xf32, #tpu.memory_space<vmem>>, %arg2: memref<1x8xi32, #tpu.memory_space<vmem>>, %arg3: memref<32x16xf32, #tpu.memory_space<vmem>>, %arg4: memref<32x1xf32, #tpu.memory_space<vmem>>, %arg5: memref<32x32xf32, #tpu.memory_space<vmem>>, %arg6: memref<32x1xf32, #tpu.memory_space<vmem>>, %arg7: memref<8x32xf32, #tpu.memory_space<vmem>>, %arg8: memref<8x1xf32, #tpu.memory_space<vmem>>, %arg9: memref<8x8xf32, #tpu.memory_space<vmem>>, %arg10: memref<1x8xf32, #tpu.memory_space<vmem>>) attributes {dimension_semantics = [#tpu.dimension_semantics<parallel>], iteration_bounds = array<i64: 1>, scalar_prefetch = 0 : i64, scratch_operands = 0 : i64, tpu.core_type = #tpu.core_type<tc>, window_params = [{transform_indices = @transform_0, window_bounds = array<i64: 16, 8>}, {transform_indices = @transform_1, window_bounds = array<i64: 1, 8>}, {pipeline_mode = #tpu.pipeline_mode<synchronous>, transform_indices = @transform_2, window_bounds = array<i64: 32, 16>}, {pipeline_mode = #tpu.pipeline_mode<synchronous>, transform_indices = @transform_3, window_bounds = array<i64: 32, 1>}, {pipeline_mode = #tpu.pipeline_mode<synchronous>, transform_indices = @transform_4, window_bounds = array<i64: 32, 32>}, {pipeline_mode = #tpu.pipeline_mode<synchronous>, transform_indices = @transform_5, window_bounds = array<i64: 32, 1>}, {pipeline_mode = #tpu.pipeline_mode<synchronous>, transform_indices = @transform_6, window_bounds = array<i64: 8, 32>}, {pipeline_mode = #tpu.pipeline_mode<synchronous>, transform_indices = @transform_7, window_bounds = array<i64: 8, 1>}, {transform_indices = @transform_8, window_bounds = array<i64: 8, 8>}, {transform_indices = @transform_9, window_bounds = array<i64: 1, 8>}]} {
    %c0 = arith.constant 0 : index
    %c0_0 = arith.constant 0 : index
    %0 = vector.load %arg1[%c0, %c0_0] : memref<16x8xf32, #tpu.memory_space<vmem>>, vector<16x8xf32>
    %c0_1 = arith.constant 0 : index
    %c0_2 = arith.constant 0 : index
    %1 = vector.load %arg3[%c0_1, %c0_2] : memref<32x16xf32, #tpu.memory_space<vmem>>, vector<32x16xf32>
    %cst = arith.constant dense<0.000000e+00> : vector<32x8xf32>
    %2 = tpu.matmul %1, %0, %cst {dimension_numbers = #tpu.dot_dimension_numbers<[1], [0], [0], [1], [0, 0, 1, 1], [], []>} : vector<32x16xf32>, vector<16x8xf32>, vector<32x8xf32> -> vector<32x8xf32>
    %c0_3 = arith.constant 0 : index
    %c0_4 = arith.constant 0 : index
    %3 = vector.load %arg4[%c0_3, %c0_4] : memref<32x1xf32, #tpu.memory_space<vmem>>, vector<32x1xf32>
    %4 = vector.broadcast %3 : vector<32x1xf32> to vector<32x8xf32>
    %5 = arith.addf %2, %4 : vector<32x8xf32>
    %6 = math.tanh %5 : vector<32x8xf32>
    %c0_5 = arith.constant 0 : index
    %c0_6 = arith.constant 0 : index
    %7 = vector.load %arg5[%c0_5, %c0_6] : memref<32x32xf32, #tpu.memory_space<vmem>>, vector<32x32xf32>
    %cst_7 = arith.constant dense<0.000000e+00> : vector<32x8xf32>
    %8 = tpu.matmul %7, %6, %cst_7 {dimension_numbers = #tpu.dot_dimension_numbers<[1], [0], [0], [1], [0, 0, 1, 1], [], []>} : vector<32x32xf32>, vector<32x8xf32>, vector<32x8xf32> -> vector<32x8xf32>
    %c0_8 = arith.constant 0 : index
    %c0_9 = arith.constant 0 : index
    %9 = vector.load %arg6[%c0_8, %c0_9] : memref<32x1xf32, #tpu.memory_space<vmem>>, vector<32x1xf32>
    %10 = vector.broadcast %9 : vector<32x1xf32> to vector<32x8xf32>
    %11 = arith.addf %8, %10 : vector<32x8xf32>
    %12 = math.tanh %11 : vector<32x8xf32>
    %c0_10 = arith.constant 0 : index
    %c0_11 = arith.constant 0 : index
    %13 = vector.load %arg7[%c0_10, %c0_11] : memref<8x32xf32, #tpu.memory_space<vmem>>, vector<8x32xf32>
    %cst_12 = arith.constant dense<0.000000e+00> : vector<8x8xf32>
    %14 = tpu.matmul %13, %12, %cst_12 {dimension_numbers = #tpu.dot_dimension_numbers<[1], [0], [0], [1], [0, 0, 1, 1], [], []>} : vector<8x32xf32>, vector<32x8xf32>, vector<8x8xf32> -> vector<8x8xf32>
    %c0_13 = arith.constant 0 : index
    %c0_14 = arith.constant 0 : index
    %15 = vector.load %arg8[%c0_13, %c0_14] : memref<8x1xf32, #tpu.memory_space<vmem>>, vector<8x1xf32>
    %16 = vector.broadcast %15 : vector<8x1xf32> to vector<8x8xf32>
    %17 = arith.addf %14, %16 : vector<8x8xf32>
    %c0_15 = arith.constant 0 : index
    %c0_16 = arith.constant 0 : index
    %18 = vector.load %arg9[%c0_15, %c0_16] : memref<8x8xf32, #tpu.memory_space<vmem>>, vector<8x8xf32>
    tpu.vector_store %arg9[%c0_15, %c0_16], %17 {strides = array<i32>} : memref<8x8xf32, #tpu.memory_space<vmem>>, vector<8x8xf32>,
    %cst_17 = arith.constant dense<0xFF800000> : vector<8xf32>
    %19 = vector.multi_reduction <maximumf>, %17, %cst_17 [0] : vector<8x8xf32> to vector<8xf32>
    %20 = vector.shape_cast %19 : vector<8xf32> to vector<1x8xf32>
    %21 = vector.broadcast %20 : vector<1x8xf32> to vector<8x8xf32>
    %22 = arith.subf %17, %21 : vector<8x8xf32>
    %23 = math.exp %22 : vector<8x8xf32>
    %cst_18 = arith.constant dense<0.000000e+00> : vector<8xf32>
    %24 = vector.multi_reduction <add>, %23, %cst_18 [0] : vector<8x8xf32> to vector<8xf32>
    %25 = vector.shape_cast %24 : vector<8xf32> to vector<1x8xf32>
    %26 = math.log %25 : vector<1x8xf32>
    %27 = arith.addf %20, %26 : vector<1x8xf32>
    %28 = vector.broadcast %27 : vector<1x8xf32> to vector<8x8xf32>
    %29 = arith.subf %17, %28 : vector<8x8xf32>
    %30 = tpu.iota {dimensions = array<i32: 0>} : vector<8x8xi32>
    %c0_19 = arith.constant 0 : index
    %c0_20 = arith.constant 0 : index
    %31 = vector.load %arg2[%c0_19, %c0_20] : memref<1x8xi32, #tpu.memory_space<vmem>>, vector<1x8xi32>
    %32 = vector.broadcast %31 : vector<1x8xi32> to vector<8x8xi32>
    %33 = arith.cmpi eq, %30, %32 : vector<8x8xi32>
    %cst_21 = arith.constant 0.000000e+00 : f32
    %34 = vector.broadcast %cst_21 : f32 to vector<8x8xf32>
    %35 = arith.select %33, %29, %34 : vector<8x8xi1>, vector<8x8xf32>
    %cst_22 = arith.constant dense<0.000000e+00> : vector<8xf32>
    %36 = vector.multi_reduction <add>, %35, %cst_22 [0] : vector<8x8xf32> to vector<8xf32>
    %37 = vector.shape_cast %36 : vector<8xf32> to vector<1x8xf32>
    %c0_23 = arith.constant 0 : index
    %c0_24 = arith.constant 0 : index
    %38 = vector.load %arg10[%c0_23, %c0_24] : memref<1x8xf32, #tpu.memory_space<vmem>>, vector<1x8xf32>
    tpu.vector_store %arg10[%c0_23, %c0_24], %37 {strides = array<i32>} : memref<1x8xf32, #tpu.memory_space<vmem>>, vector<1x8xf32>,
    return
  }
  func.func @transform_0(%arg0: i32) -> (i32, i32) {
    %c0_i32 = arith.constant 0 : i32
    %c0_i32_0 = arith.constant 0 : i32
    return %c0_i32, %arg0 : i32, i32
  }
  func.func @transform_1(%arg0: i32) -> (i32, i32) {
    %c0_i32 = arith.constant 0 : i32
    %c0_i32_0 = arith.constant 0 : i32
    return %c0_i32, %arg0 : i32, i32
  }
  func.func @transform_2(%arg0: i32) -> (i32, i32) {
    %c0_i32 = arith.constant 0 : i32
    %c0_i32_0 = arith.constant 0 : i32
    %c0_i32_1 = arith.constant 0 : i32
    return %c0_i32, %c0_i32_0 : i32, i32
  }
  func.func @transform_3(%arg0: i32) -> (i32, i32) {
    %c0_i32 = arith.constant 0 : i32
    %c0_i32_0 = arith.constant 0 : i32
    %c0_i32_1 = arith.constant 0 : i32
    return %c0_i32, %c0_i32_0 : i32, i32
  }
  func.func @transform_4(%arg0: i32) -> (i32, i32) {
    %c0_i32 = arith.constant 0 : i32
    %c0_i32_0 = arith.constant 0 : i32
    %c0_i32_1 = arith.constant 0 : i32
    return %c0_i32, %c0_i32_0 : i32, i32
  }
  func.func @transform_5(%arg0: i32) -> (i32, i32) {
    %c0_i32 = arith.constant 0 : i32
    %c0_i32_0 = arith.constant 0 : i32
    %c0_i32_1 = arith.constant 0 : i32
    return %c0_i32, %c0_i32_0 : i32, i32
  }
  func.func @transform_6(%arg0: i32) -> (i32, i32) {
    %c0_i32 = arith.constant 0 : i32
    %c0_i32_0 = arith.constant 0 : i32
    %c0_i32_1 = arith.constant 0 : i32
    return %c0_i32, %c0_i32_0 : i32, i32
  }
  func.func @transform_7(%arg0: i32) -> (i32, i32) {
    %c0_i32 = arith.constant 0 : i32
    %c0_i32_0 = arith.constant 0 : i32
    %c0_i32_1 = arith.constant 0 : i32
    return %c0_i32, %c0_i32_0 : i32, i32
  }
  func.func @transform_8(%arg0: i32) -> (i32, i32) {
    %c0_i32 = arith.constant 0 : i32
    %c0_i32_0 = arith.constant 0 : i32
    return %c0_i32, %arg0 : i32, i32
  }
  func.func @transform_9(%arg0: i32) -> (i32, i32) {
    %c0_i32 = arith.constant 0 : i32
    %c0_i32_0 = arith.constant 0 : i32
    return %c0_i32, %arg0 : i32, i32
  }
}

</mosaic_0001>

<llo_original>
// kernel: tpu_custom_call.1
$region0: #{tpu_custom_call.1}
  #allocation0 [shape = 'u32[]', space=smem, size = 0x4, offset = 0x4, fixed_abs, tag = 'smem constant byte address 0x4 - core index']
  #allocation1 [shape = 'u32[144,128]{1,0:T(1,128)}', space=vmem, size = 0x12000, scoped, tag = 'internal scratch']
  %s0 = inlined_call_operand.vmem [shape: f32[16,8], index: 0, kind: input, shape index: {}]
  %s1 = inlined_call_operand.vmem [shape: s32[1,8], index: 1, kind: input, shape index: {}]
  %s2 = inlined_call_operand.vmem [shape: f32[32,16], index: 2, kind: input, shape index: {}]
  %s3 = inlined_call_operand.vmem [shape: f32[32,1], index: 3, kind: input, shape index: {}]
  %s4 = inlined_call_operand.vmem [shape: f32[32,32], index: 4, kind: input, shape index: {}]
  %s5 = inlined_call_operand.vmem [shape: f32[32,1], index: 5, kind: input, shape index: {}]
  %s6 = inlined_call_operand.vmem [shape: f32[8,32], index: 6, kind: input, shape index: {}]
  %s7 = inlined_call_operand.vmem [shape: f32[8,1], index: 7, kind: input, shape index: {}]
  %s8 = inlined_call_operand.hbm [shape: f32[8,8], index: 8, kind: output, shape index: {0}]
  %s9 = inlined_call_operand.hbm [shape: f32[1,8], index: 9, kind: output, shape index: {1}]
  %10 = xla_tuple %s8, %s9
  %s11 = sld [smem:[#allocation0]]
  $region50: #{tpu_custom_call.1} parent=0
    _
  %s13 = ssub.s32 1, %s11
  %s14 = scalar_select 0, %s13, %s11
  $region1: #{tpu_custom_call.1} parent=0
    #allocation2 [shape = 'u8[4096]{0}', space=vmem, size = 0x1000, scoped, tag = 'output window, operand 0, single buffered']
    #allocation3 [shape = 's32[1]{0}', space=sflag, size = 0x4, scoped, tag = 'scoped memory for tpu_custom_call.1']
    #allocation4 [shape = 'u8[512]{0}', space=vmem, size = 0x400, scoped, tag = 'output window, operand 1, single buffered']
    #allocation5 [shape = 's32[1]{0}', space=sflag, size = 0x4, scoped, tag = 'scoped memory for tpu_custom_call.1']
    %15 = vsyncpa [#allocation3], 0
    %16 = vsyncpa [#allocation5], 0
    // Predicated region
    $region2: #{tpu_custom_call.1} parent=1 // pred_check
      _
    $region3: #{tpu_custom_call.1} parent=1 // pred_check_branch
      %18 = sbr.rel (0) target = $region5
    $region4: #{tpu_custom_call.1} parent=1 // pred_region
      _
    $region5: #{tpu_custom_call.1} parent=1 // pred_fallthru
      _
    // Predicated region
    $region6: #{tpu_custom_call.1} parent=1 // pred_check
      _
    $region7: #{tpu_custom_call.1} parent=1 // pred_check_branch
      %20 = sbr.rel (0) target = $region9
    $region8: #{tpu_custom_call.1} parent=1 // pred_region
      _
    $region9: #{tpu_custom_call.1} parent=1 // pred_fallthru
      _
    // Predicated region
    $region10: #{tpu_custom_call.1} parent=1 // pred_check
      _
    $region11: #{tpu_custom_call.1} parent=1 // pred_check_branch
      %22 = sbr.rel (0) target = $region13
    $region12: #{tpu_custom_call.1} parent=1 // pred_region
      _
    $region13: #{tpu_custom_call.1} parent=1 // pred_fallthru
      _
    // Predicated region
    $region14: #{tpu_custom_call.1} parent=1 // pred_check
      _
    $region15: #{tpu_custom_call.1} parent=1 // pred_check_branch
      %24 = sbr.rel (0) target = $region17
    $region16: #{tpu_custom_call.1} parent=1 // pred_region
      _
    $region17: #{tpu_custom_call.1} parent=1 // pred_fallthru
      _
    // Predicated region
    $region18: #{tpu_custom_call.1} parent=1 // pred_check
      _
    $region19: #{tpu_custom_call.1} parent=1 // pred_check_branch
      %26 = sbr.rel (0) target = $region21
    $region20: #{tpu_custom_call.1} parent=1 // pred_region
      _
    $region21: #{tpu_custom_call.1} parent=1 // pred_fallthru
      _
    // Predicated region
    $region22: #{tpu_custom_call.1} parent=1 // pred_check
      _
    $region23: #{tpu_custom_call.1} parent=1 // pred_check_branch
      %28 = sbr.rel (0) target = $region25
    $region24: #{tpu_custom_call.1} parent=1 // pred_region
      _
    $region25: #{tpu_custom_call.1} parent=1 // pred_fallthru
      _
    // Predicated region
    $region26: #{tpu_custom_call.1} parent=1 // pred_check
      _
    $region27: #{tpu_custom_call.1} parent=1 // pred_check_branch
      %30 = sbr.rel (0) target = $region29
    $region28: #{tpu_custom_call.1} parent=1 // pred_region
      _
    $region29: #{tpu_custom_call.1} parent=1 // pred_fallthru
      _
    // Predicated region
    $region30: #{tpu_custom_call.1} parent=1 // pred_check
      _
    $region31: #{tpu_custom_call.1} parent=1 // pred_check_branch
      %32 = sbr.rel (0) target = $region33
    $region32: #{tpu_custom_call.1} parent=1 // pred_region
      _
    $region33: #{tpu_custom_call.1} parent=1 // pred_fallthru
      _
    %v33 = vld [vmem:[%s0] sm:$0xff]
    %v34 = vld [vmem:[%s0 + $0x8] sm:$0xff]
    %v35 = vld [vmem:[%s2] sm:$0xff]
    %v36 = vld [vmem:[%s2 + $0x8] sm:$0xff]
    %v37 = vld [vmem:[%s2 + $0x10] sm:$0xff]
    %v38 = vld [vmem:[%s2 + $0x18] sm:$0xff]
    %v39 = vld [vmem:[%s3] sm:$0xff]
    %v40 = vld [vmem:[%s3 + $0x8] sm:$0xff]
    %v41 = vld [vmem:[%s3 + $0x10] sm:$0xff]
    %v42 = vld [vmem:[%s3 + $0x18] sm:$0xff]
    %44 = vset.pattern.permute.xlu0 0
    %45 = vperm.xlu0 %44, %v39
    %v46 = vpop.permute.xlu0 %45
    %49 = vset.pattern.permute.xlu0 0
    %50 = vperm.xlu0 %49, %v40
    %v51 = vpop.permute.xlu0 %50
    %54 = vset.pattern.permute.xlu0 0
    %55 = vperm.xlu0 %54, %v41
    %v56 = vpop.permute.xlu0 %55
    %59 = vset.pattern.permute.xlu0 0
    %60 = vperm.xlu0 %59, %v42
    %v61 = vpop.permute.xlu0 %60
    %vm63 = vcmask 130048
    %v65 = vsel %vm63, %v35, 0
    %v68 = vsel %vm63, %v36, 0
    %v71 = vsel %vm63, %v37, 0
    %v74 = vsel %vm63, %v38, 0
    %76 = vmatprep.subr.mxu0 0.0
    %77 = vmatpush1.msra.mxu0 %v33
    %78 = vmatprep.subr.mxu0 0.0
    %79 = vmatpush1.msra.mxu0 %v34
    %80 = vmatprep.subr.mxu0 0.0
    %81 = vmatpush1.msra.mxu0 0.0
    %82 = vmatprep.subr.mxu0 0.0
    %83 = vmatpush1.msra.mxu0 0.0
    %84 = vmatprep.subr.mxu0 0.0
    %85 = vmatpush1.msra.mxu0 0.0
    %86 = vmatprep.subr.mxu0 0.0
    %87 = vmatpush1.msra.mxu0 0.0
    %88 = vmatprep.subr.mxu0 0.0
    %89 = vmatpush1.msra.mxu0 0.0
    %90 = vmatprep.subr.mxu0 0.0
    %91 = vmatpush1.msra.mxu0 0.0
    %92 = vmatprep.subr.mxu0 0.0
    %93 = vmatpush1.msra.mxu0 0.0
    %94 = vmatprep.subr.mxu0 0.0
    %95 = vmatpush1.msra.mxu0 0.0
    %96 = vmatprep.subr.mxu0 0.0
    %97 = vmatpush1.msra.mxu0 0.0
    %98 = vmatprep.subr.mxu0 0.0
    %99 = vmatpush1.msra.mxu0 0.0
    %100 = vmatprep.subr.mxu0 0.0
    %101 = vmatpush1.msra.mxu0 0.0
    %102 = vmatprep.subr.mxu0 0.0
    %103 = vmatpush1.msra.mxu0 0.0
    %104 = vmatprep.subr.mxu0 0.0
    %105 = vmatpush1.msra.mxu0 0.0
    %106 = vmatprep.subr.mxu0 0.0
    %107 = vmatpush1.msra.mxu0 0.0
    %108 = vmatprep.subr.mxu0 0.0
    %109 = vmatpush1.msra.mxu0 0.0
    %110 = vmatprep.subr.mxu0 0.0
    %111 = vmatpush1.msra.mxu0 0.0
    %112 = vmatprep.subr.mxu0 0.0
    %113 = vmatpush1.msra.mxu0 0.0
    %114 = vmatprep.subr.mxu0 0.0
    %115 = vmatpush1.msra.mxu0 0.0
    %116 = vmatprep.subr.mxu0 0.0
    %117 = vmatpush1.msra.mxu0 0.0
    %118 = vmatprep.subr.mxu0 0.0
    %119 = vmatpush1.msra.mxu0 0.0
    %120 = vmatprep.subr.mxu0 0.0
    %121 = vmatpush1.msra.mxu0 0.0
    %122 = vmatprep.subr.mxu0 0.0
    %123 = vmatpush1.msra.mxu0 0.0
    %124 = vmatprep.subr.mxu0 0.0
    %125 = vmatpush1.msra.mxu0 0.0
    %126 = vmatprep.subr.mxu0 0.0
    %127 = vmatpush1.msra.mxu0 0.0
    %128 = vmatprep.subr.mxu0 0.0
    %129 = vmatpush1.msra.mxu0 0.0
    %130 = vmatprep.subr.mxu0 0.0
    %131 = vmatpush1.msra.mxu0 0.0
    %132 = vmatprep.subr.mxu0 0.0
    %133 = vmatpush1.msra.mxu0 0.0
    %134 = vmatprep.subr.mxu0 0.0
    %135 = vmatpush1.msra.mxu0 0.0
    %136 = vmatprep.subr.mxu0 0.0
    %137 = vmatpush1.msra.mxu0 0.0
    %138 = vmatprep.subr.mxu0 0.0
    %139 = vmatpush1.msra.mxu0 0.0
    %140 = vmatprep.mubr.f32.mxu0 0.0
    %141 = vmatmul.mubr.f32.gmra.mrb[0].mxu0 %v65
    %v142 = vpop.f32.mrb[0].mxu0
    %v143 = vadd.f32 %v46, %v142
    %v144 = vpop.f32.mrb[0].mxu0
    %145 = vmatprep.mubr.f32.mxu0 0.0
    %146 = vmatmul.mubr.f32.gmra.mrb[0].mxu0 %v68
    %v147 = vpop.f32.mrb[0].mxu0
    %v148 = vadd.f32 %v51, %v147
    %v149 = vpop.f32.mrb[0].mxu0
    %150 = vmatprep.mubr.f32.mxu0 0.0
    %151 = vmatmul.mubr.f32.gmra.mrb[0].mxu0 %v71
    %v152 = vpop.f32.mrb[0].mxu0
    %v153 = vadd.f32 %v56, %v152
    %v154 = vpop.f32.mrb[0].mxu0
    %155 = vmatprep.mubr.f32.mxu0 0.0
    %156 = vmatmul.mubr.f32.gmra.mrb[0].mxu0 %v74
    %v157 = vpop.f32.mrb[0].mxu0
    %v158 = vadd.f32 %v61, %v157
    %v159 = vpop.f32.mrb[0].mxu0
    %160 = vdwg.mxu0
    %v161 = vtanh.pop %v143
    %v162 = vtanh.pop %v148
    %v163 = vtanh.pop %v153
    %v164 = vtanh.pop %v158
    %v165 = vld [vmem:[%s4] sm:$0xff]
    %v166 = vld [vmem:[%s4 + $0x8] sm:$0xff]
    %v167 = vld [vmem:[%s4 + $0x10] sm:$0xff]
    %v168 = vld [vmem:[%s4 + $0x18] sm:$0xff]
    %v169 = vld [vmem:[%s5] sm:$0xff]
    %v170 = vld [vmem:[%s5 + $0x8] sm:$0xff]
    %v171 = vld [vmem:[%s5 + $0x10] sm:$0xff]
    %v172 = vld [vmem:[%s5 + $0x18] sm:$0xff]
    %174 = vset.pattern.permute.xlu0 0
    %175 = vperm.xlu0 %174, %v169
    %v176 = vpop.permute.xlu0 %175
    %179 = vset.pattern.permute.xlu0 0
    %180 = vperm.xlu0 %179, %v170
    %v181 = vpop.permute.xlu0 %180
    %184 = vset.pattern.permute.xlu0 0
    %185 = vperm.xlu0 %184, %v171
    %v186 = vpop.permute.xlu0 %185
    %189 = vset.pattern.permute.xlu0 0
    %190 = vperm.xlu0 %189, %v172
    %v191 = vpop.permute.xlu0 %190
    %vm193 = vcmask 261120
    %v195 = vsel %vm193, %v165, 0
    %v198 = vsel %vm193, %v166, 0
    %v201 = vsel %vm193, %v167, 0
    %v204 = vsel %vm193, %v168, 0
    %206 = vmatprep.subr.mxu0 0.0
    %207 = vmatpush1.msra.mxu0 %v161
    %208 = vmatprep.subr.mxu0 0.0
    %209 = vmatpush1.msra.mxu0 %v162
    %210 = vmatprep.subr.mxu0 0.0
    %211 = vmatpush1.msra.mxu0 %v163
    %212 = vmatprep.subr.mxu0 0.0
    %213 = vmatpush1.msra.mxu0 %v164
    %214 = vmatprep.subr.mxu0 0.0
    %215 = vmatpush1.msra.mxu0 0.0
    %216 = vmatprep.subr.mxu0 0.0
    %217 = vmatpush1.msra.mxu0 0.0
    %218 = vmatprep.subr.mxu0 0.0
    %219 = vmatpush1.msra.mxu0 0.0
    %220 = vmatprep.subr.mxu0 0.0
    %221 = vmatpush1.msra.mxu0 0.0
    %222 = vmatprep.subr.mxu0 0.0
    %223 = vmatpush1.msra.mxu0 0.0
    %224 = vmatprep.subr.mxu0 0.0
    %225 = vmatpush1.msra.mxu0 0.0
    %226 = vmatprep.subr.mxu0 0.0
    %227 = vmatpush1.msra.mxu0 0.0
    %228 = vmatprep.subr.mxu0 0.0
    %229 = vmatpush1.msra.mxu0 0.0
    %230 = vmatprep.subr.mxu0 0.0
    %231 = vmatpush1.msra.mxu0 0.0
    %232 = vmatprep.subr.mxu0 0.0
    %233 = vmatpush1.msra.mxu0 0.0
    %234 = vmatprep.subr.mxu0 0.0
    %235 = vmatpush1.msra.mxu0 0.0
    %236 = vmatprep.subr.mxu0 0.0
    %237 = vmatpush1.msra.mxu0 0.0
    %238 = vmatprep.subr.mxu0 0.0
    %239 = vmatpush1.msra.mxu0 0.0
    %240 = vmatprep.subr.mxu0 0.0
    %241 = vmatpush1.msra.mxu0 0.0
    %242 = vmatprep.subr.mxu0 0.0
    %243 = vmatpush1.msra.mxu0 0.0
    %244 = vmatprep.subr.mxu0 0.0
    %245 = vmatpush1.msra.mxu0 0.0
    %246 = vmatprep.subr.mxu0 0.0
    %247 = vmatpush1.msra.mxu0 0.0
    %248 = vmatprep.subr.mxu0 0.0
    %249 = vmatpush1.msra.mxu0 0.0
    %250 = vmatprep.subr.mxu0 0.0
    %251 = vmatpush1.msra.mxu0 0.0
    %252 = vmatprep.subr.mxu0 0.0
    %253 = vmatpush1.msra.mxu0 0.0
    %254 = vmatprep.subr.mxu0 0.0
    %255 = vmatpush1.msra.mxu0 0.0
    %256 = vmatprep.subr.mxu0 0.0
    %257 = vmatpush1.msra.mxu0 0.0
    %258 = vmatprep.subr.mxu0 0.0
    %259 = vmatpush1.msra.mxu0 0.0
    %260 = vmatprep.subr.mxu0 0.0
    %261 = vmatpush1.msra.mxu0 0.0
    %262 = vmatprep.subr.mxu0 0.0
    %263 = vmatpush1.msra.mxu0 0.0
    %264 = vmatprep.subr.mxu0 0.0
    %265 = vmatpush1.msra.mxu0 0.0
    %266 = vmatprep.subr.mxu0 0.0
    %267 = vmatpush1.msra.mxu0 0.0
    %268 = vmatprep.subr.mxu0 0.0
    %269 = vmatpush1.msra.mxu0 0.0
    %270 = vmatprep.mubr.f32.mxu0 0.0
    %271 = vmatmul.mubr.f32.gmra.mrb[0].mxu0 %v195
    %v272 = vpop.f32.mrb[0].mxu0
    %v273 = vadd.f32 %v176, %v272
    %v274 = vpop.f32.mrb[0].mxu0
    %275 = vmatprep.mubr.f32.mxu0 0.0
    %276 = vmatmul.mubr.f32.gmra.mrb[0].mxu0 %v198
    %v277 = vpop.f32.mrb[0].mxu0
    %v278 = vadd.f32 %v181, %v277
    %v279 = vpop.f32.mrb[0].mxu0
    %280 = vmatprep.mubr.f32.mxu0 0.0
    %281 = vmatmul.mubr.f32.gmra.mrb[0].mxu0 %v201
    %v282 = vpop.f32.mrb[0].mxu0
    %v283 = vadd.f32 %v186, %v282
    %v284 = vpop.f32.mrb[0].mxu0
    %285 = vmatprep.mubr.f32.mxu0 0.0
    %286 = vmatmul.mubr.f32.gmra.mrb[0].mxu0 %v204
    %v287 = vpop.f32.mrb[0].mxu0
    %v288 = vadd.f32 %v191, %v287
    %v289 = vpop.f32.mrb[0].mxu0
    %290 = vdwg.mxu0
    %v291 = vtanh.pop %v273
    %v292 = vtanh.pop %v278
    %v293 = vtanh.pop %v283
    %v294 = vtanh.pop %v288
    %v295 = vld [vmem:[%s6] sm:$0xff]
    %v296 = vld [vmem:[%s7] sm:$0xff]
    %298 = vset.pattern.permute.xlu0 0
    %299 = vperm.xlu0 %298, %v296
    %v300 = vpop.permute.xlu0 %299
    %v303 = vsel %vm193, %v295, 0
    %305 = vmatprep.subr.mxu0 0.0
    %306 = vmatpush1.msra.mxu0 %v291
    %307 = vmatprep.subr.mxu0 0.0
    %308 = vmatpush1.msra.mxu0 %v292
    %309 = vmatprep.subr.mxu0 0.0
    %310 = vmatpush1.msra.mxu0 %v293
    %311 = vmatprep.subr.mxu0 0.0
    %312 = vmatpush1.msra.mxu0 %v294
    %313 = vmatprep.subr.mxu0 0.0
    %314 = vmatpush1.msra.mxu0 0.0
    %315 = vmatprep.subr.mxu0 0.0
    %316 = vmatpush1.msra.mxu0 0.0
    %317 = vmatprep.subr.mxu0 0.0
    %318 = vmatpush1.msra.mxu0 0.0
    %319 = vmatprep.subr.mxu0 0.0
    %320 = vmatpush1.msra.mxu0 0.0
    %321 = vmatprep.subr.mxu0 0.0
    %322 = vmatpush1.msra.mxu0 0.0
    %323 = vmatprep.subr.mxu0 0.0
    %324 = vmatpush1.msra.mxu0 0.0
    %325 = vmatprep.subr.mxu0 0.0
    %326 = vmatpush1.msra.mxu0 0.0
    %327 = vmatprep.subr.mxu0 0.0
    %328 = vmatpush1.msra.mxu0 0.0
    %329 = vmatprep.subr.mxu0 0.0
    %330 = vmatpush1.msra.mxu0 0.0
    %331 = vmatprep.subr.mxu0 0.0
    %332 = vmatpush1.msra.mxu0 0.0
    %333 = vmatprep.subr.mxu0 0.0
    %334 = vmatpush1.msra.mxu0 0.0
    %335 = vmatprep.subr.mxu0 0.0
    %336 = vmatpush1.msra.mxu0 0.0
    %337 = vmatprep.subr.mxu0 0.0
    %338 = vmatpush1.msra.mxu0 0.0
    %339 = vmatprep.subr.mxu0 0.0
    %340 = vmatpush1.msra.mxu0 0.0
    %341 = vmatprep.subr.mxu0 0.0
    %342 = vmatpush1.msra.mxu0 0.0
    %343 = vmatprep.subr.mxu0 0.0
    %344 = vmatpush1.msra.mxu0 0.0
    %345 = vmatprep.subr.mxu0 0.0
    %346 = vmatpush1.msra.mxu0 0.0
    %347 = vmatprep.subr.mxu0 0.0
    %348 = vmatpush1.msra.mxu0 0.0
    %349 = vmatprep.subr.mxu0 0.0
    %350 = vmatpush1.msra.mxu0 0.0
    %351 = vmatprep.subr.mxu0 0.0
    %352 = vmatpush1.msra.mxu0 0.0
    %353 = vmatprep.subr.mxu0 0.0
    %354 = vmatpush1.msra.mxu0 0.0
    %355 = vmatprep.subr.mxu0 0.0
    %356 = vmatpush1.msra.mxu0 0.0
    %357 = vmatprep.subr.mxu0 0.0
    %358 = vmatpush1.msra.mxu0 0.0
    %359 = vmatprep.subr.mxu0 0.0
    %360 = vmatpush1.msra.mxu0 0.0
    %361 = vmatprep.subr.mxu0 0.0
    %362 = vmatpush1.msra.mxu0 0.0
    %363 = vmatprep.subr.mxu0 0.0
    %364 = vmatpush1.msra.mxu0 0.0
    %365 = vmatprep.subr.mxu0 0.0
    %366 = vmatpush1.msra.mxu0 0.0
    %367 = vmatprep.subr.mxu0 0.0
    %368 = vmatpush1.msra.mxu0 0.0
    %369 = vmatprep.mubr.f32.mxu0 0.0
    %370 = vmatmul.mubr.f32.gmra.mrb[0].mxu0 %v303
    %v371 = vpop.f32.mrb[0].mxu0
    %v372 = vadd.f32 %v300, %v371
    %v373 = vpop.f32.mrb[0].mxu0
    %374 = vdwg.mxu0
    %vm375 = vcmask 64512
    %376 = vst.msk [vmem:[#allocation2] sm:$0xff] %vm375, %v372
    %v377 = vsel %vm375, %v372, -inf
    %v378 = vrot.slane %v377, 4
    %v379 = vmax.f32 %v377, %v378
    %v380 = vrot.slane %v379, 2
    %v381 = vmax.f32 %v379, %v380
    %v382 = vrot.slane %v381, 1
    %v383 = vmax.f32 %v381, %v382
    %v384 = vsub.f32 %v372, %v383
    %v385 = vmul.f32 %v384, 1.442695
    %v386 = vpow.pop %v385
    %v387 = vsel %vm375, %v386, 0.0
    %v388 = vrot.slane %v387, 4
    %v389 = vadd.f32 %v387, %v388
    %v390 = vrot.slane %v389, 2
    %v391 = vadd.f32 %v389, %v390
    %v392 = vrot.slane %v391, 1
    %v393 = vadd.f32 %v391, %v392
    %v394 = vlog2.pop %v393
    %v395 = vmul.f32 %v394, 0.6931472
    %v396 = vadd.f32 %v383, %v395
    %v397 = vsub.f32 %v372, %v396
    %v398 = vlaneseq
    %v399 = vshrl.u32 %v398, 7
    %v400 = vld [vmem:[%s1] sm:$0x1]
    %v401 = vlaneseq
    %v402 = vshrl.u32 %v401, 7
    %v403 = vsub.s32 0, %v402
    %v404 = vrot.slane %v400, %v403
    %vm405 = vcmp.eq.s32.totalorder %v399, %v404
    %v406 = vsel %vm405, %v397, 0.0
    %v407 = vsel %vm375, %v406, 0.0
    %v408 = vrot.slane %v407, 4
    %v409 = vadd.f32 %v407, %v408
    %v410 = vrot.slane %v409, 2
    %v411 = vadd.f32 %v409, %v410
    %v412 = vrot.slane %v411, 1
    %v413 = vadd.f32 %v411, %v412
    %vm414 = vcmask 57344
    %415 = vst.msk [vmem:[#allocation4] sm:$0x1] %vm414, %v413
    // Predicated region
    $region34: #{tpu_custom_call.1} parent=1 // pred_check
      _
    $region35: #{tpu_custom_call.1} parent=1 // pred_check_branch
      %417 = sbr.rel (0) target = $region37
    $region36: #{tpu_custom_call.1} parent=1 // pred_region
      %s419 = ssub.s32 128, 128
      %420 = vsyncadd [#allocation3], %s419
      %s422 = sshll.u32 [#allocation2], 4
      %s423 = int_to_ptr.vmem [resolvable:$true] %s422
      %425 = dma.vmem_to_hbm [thread:$0]  %s423, 128, %s8, [#allocation3]
    $region37: #{tpu_custom_call.1} parent=1 // pred_fallthru
      _
    // Predicated region
    $region38: #{tpu_custom_call.1} parent=1 // pred_check
      _
    $region39: #{tpu_custom_call.1} parent=1 // pred_check_branch
      %427 = sbr.rel (0) target = $region41
    $region40: #{tpu_custom_call.1} parent=1 // pred_region
      %s429 = ssub.s32 16, 16
      %430 = vsyncadd [#allocation5], %s429
      %s432 = sshll.u32 [#allocation4], 4
      %s433 = int_to_ptr.vmem [resolvable:$true] %s432
      %435 = dma.vmem_to_hbm [thread:$0]  %s433, 16, %s9, [#allocation5]
    $region41: #{tpu_custom_call.1} parent=1 // pred_fallthru
      _
    // Predicated region
    $region42: #{tpu_custom_call.1} parent=1 // pred_check
      _
    $region43: #{tpu_custom_call.1} parent=1 // pred_check_branch
      %437 = sbr.rel (0) target = $region45
    $region44: #{tpu_custom_call.1} parent=1 // pred_region
      %438 = dma.done [#allocation3], 128
    $region45: #{tpu_custom_call.1} parent=1 // pred_fallthru
      _
    // Predicated region
    $region46: #{tpu_custom_call.1} parent=1 // pred_check
      _
    $region47: #{tpu_custom_call.1} parent=1 // pred_check_branch
      %440 = sbr.rel (0) target = $region49
    $region48: #{tpu_custom_call.1} parent=1 // pred_region
      %441 = dma.done [#allocation5], 16
    $region49: #{tpu_custom_call.1} parent=1 // pred_fallthru
      _
    %442 = vsyncpa [#allocation3], 1
    %443 = vsyncpa [#allocation5], 1

</llo_original>
